<compile_context>
chip_gen: v7x
topology: tpu7x:2x2x1
jax: 0.10.0
libtpu: 0.0.40
codegen_flags: <defaults>
</compile_context>

<pallas_src>
import math
import functools

import jax
import jax.numpy as jnp
from jax import lax
from jax.experimental import pallas as pl
from jax.experimental.pallas import tpu as pltpu


def make_pe_table(max_len: int, d_model: int, dtype=jnp.float32):
    """Deterministic sinusoidal table, identical to the PyTorch __init__."""
    position = jnp.arange(max_len, dtype=jnp.float32)[:, None]          # (L, 1)
    div_term = jnp.exp(
        jnp.arange(0, d_model, 2, dtype=jnp.float32) * (-math.log(10000.0) / d_model)
    )                                                                    # (D/2,)
    angles = position * div_term                                         # (L, D/2)
    pe = jnp.zeros((max_len, d_model), dtype=jnp.float32)
    pe = pe.at[:, 0::2].set(jnp.sin(angles))
    pe = pe.at[:, 1::2].set(jnp.cos(angles))
    return pe.astype(dtype)


def _hash_u32(v):
    """lowbias32-style integer hash on uint32 vectors (VPU-only ops)."""
    v = v ^ (v >> 16)
    v = v * jnp.uint32(0x7FEB352D)
    v = v ^ (v >> 15)
    v = v * jnp.uint32(0x846CA68B)
    v = v ^ (v >> 16)
    return v


def _pe_dropout_kernel(seed_ref, x_ref, pe_ref, o_ref, *,
                       p: float, training: bool,
                       rows_per_block: int, rows_per_batch: int, lanes: int):
    # x_ref / pe_ref / o_ref are (TR, C) VMEM tiles (batch dim squeezed).
    y = x_ref[...] + pe_ref[...]          # straight per-vreg VPU add

    if training and p > 0.0:
        rt = pl.program_id(0)             # row-tile index (slow axis)
        b = pl.program_id(1)              # batch index   (fast axis)
        seed = seed_ref[0]

        # Unique global element counter -> dropout mask never repeats across
        # tiles or batch elements.
        base = b * rows_per_batch + rt * rows_per_block            # int32 scalar
        row = lax.broadcasted_iota(jnp.int32, y.shape, 0)
        lane = lax.broadcasted_iota(jnp.int32, y.shape, 1)
        ctr = ((base + row).astype(jnp.uint32) * jnp.uint32(lanes)
               + lane.astype(jnp.uint32))
        bits = _hash_u32(ctr ^ (seed.astype(jnp.uint32) * jnp.uint32(0x9E3779B1)))

        # Integer keep-test: top 31 bits vs. round(p * 2^31) (signed compare).
        bits31 = (bits >> 1).astype(jnp.int32)
        thresh = jnp.int32(min(int(round(p * 2.0 ** 31)), 2 ** 31 - 1))
        keep = bits31 >= thresh

        scale = jnp.asarray(1.0 / (1.0 - p), dtype=y.dtype)
        y = jnp.where(keep, y * scale, jnp.zeros_like(y))

    o_ref[...] = y.astype(o_ref.dtype)


def positional_encoding(x, pe, seed, *, p: float = 0.1, training: bool = True,
                        row_tile: int = 512):
    """x: (B, S, D); pe: (max_len, D) with max_len >= S; seed: (1,) int32."""
    B, S, D = x.shape
    assert pe.shape[0] >= S and pe.shape[1] == D
    pe_s = pe[:S].astype(x.dtype)         # pre-cast: halves pe DMA bytes for bf16

    # Lane-dense view: last dim = 128 whenever possible (free reshape, no transpose).
    if (S * D) % 128 == 0:
        C = 128
        R = (S * D) // 128
    else:
        C = D                              # fallback: full-extent last dim
        R = S
    xv = x.reshape(B, R, C)
    pev = pe_s.reshape(R, C)

    # Row tile: big enough to amortize per-step overhead, small enough to fit
    # every generation's scoped-VMEM budget (512*128*4B = 256 KiB per buffer).
    TR = R if R <= row_tile else row_tile
    n_rt = pl.cdiv(R, TR)

    itemsize = jnp.dtype(x.dtype).itemsize
    cost = pl.CostEstimate(
        flops=2 * B * S * D,
        bytes_accessed=(2 * B * S * D + S * D) * itemsize,
        transcendentals=0,
    )

    kernel = functools.partial(
        _pe_dropout_kernel, p=float(p), training=bool(training),
        rows_per_block=TR, rows_per_batch=R, lanes=C)

    yv = pl.pallas_call(
        kernel,
        out_shape=jax.ShapeDtypeStruct((B, R, C), x.dtype),
        grid_spec=pltpu.PrefetchScalarGridSpec(
            num_scalar_prefetch=1,                 # seed lands in SMEM
            grid=(n_rt, B),                        # batch fastest -> pe stays resident
            in_specs=[
                # x tile: leading batch dim squeezed, kernel sees (TR, C)
                pl.BlockSpec((None, TR, C), lambda r, b, seed: (b, r, 0)),
                # pe tile: varies only with the slow row-tile axis
                pl.BlockSpec((TR, C),       lambda r, b, seed: (r, 0)),
            ],
            out_specs=pl.BlockSpec((None, TR, C), lambda r, b, seed: (b, r, 0)),
        ),
        compiler_params=pltpu.CompilerParams(
            dimension_semantics=("parallel", "parallel"),   # both axes independent
        ),
        cost_estimate=cost,
    )(seed, xv, pev)

    return yv.reshape(B, S, D)


if __name__ == "__main__":
    B, S, D = 2, 8, 32
    MAX_LEN = 5000
    P = 0.1

    key = jax.random.PRNGKey(0)
    x = jax.random.normal(key, (B, S, D), dtype=jnp.float32)
    pe = make_pe_table(MAX_LEN, D)
    seed = jnp.array([0], dtype=jnp.int32)

    # Train-mode forward (matches nn.Dropout default training state).
    y_train = jax.block_until_ready(positional_encoding(x, pe, seed, p=P, training=True))

    # Eval-mode forward (dropout = identity) — deterministic, check vs reference.
    y_eval = jax.block_until_ready(positional_encoding(x, pe, seed, p=P, training=False))
    ref = x + pe[:S][None, :, :]
    assert jnp.allclose(y_eval, ref, atol=1e-6, rtol=1e-6)

    # Sanity: train-mode output elements are either 0 or (x+pe)/(1-p).
    nz = y_train != 0.0
    assert jnp.allclose(
        jnp.where(nz, y_train, 0.0), jnp.where(nz, ref / (1.0 - P), 0.0),
        atol=1e-5, rtol=1e-5,
    )
    # TODO(synk): dropout mask comes from a counter-based hash PRNG (seed +
    # global element index), so it cannot bit-match torch's RNG stream;
    # distributional semantics (keep prob 1-p, 1/(1-p) scaling) match.

    print("KERNEL_OK")
</pallas_src>

<mosaic_0001>
module attributes {stable_mosaic.version = 11 : i64} {
  func.func @_pe_dropout_kernel(%arg0: i32, %arg1: i32, %arg2: memref<1xi32, #tpu.memory_space<smem>>, %arg3: memref<1x2x128xf32, #tpu.memory_space<vmem>>, %arg4: memref<2x128xf32, #tpu.memory_space<vmem>>, %arg5: memref<1x2x128xf32, #tpu.memory_space<vmem>>) attributes {dimension_semantics = [#tpu.dimension_semantics<parallel>, #tpu.dimension_semantics<parallel>], iteration_bounds = array<i64: 1, 2>, scalar_prefetch = 1 : i64, scratch_operands = 0 : i64, tpu.core_type = #tpu.core_type<tc>, window_params = [{transform_indices = @transform_0, window_bounds = array<i64: 1, 2, 128>}, {transform_indices = @transform_1, window_bounds = array<i64: 2, 128>}, {transform_indices = @transform_2, window_bounds = array<i64: 1, 2, 128>}]} {
    %c0 = arith.constant 0 : index
    %c0_0 = arith.constant 0 : index
    %c0_1 = arith.constant 0 : index
    %0 = vector.load %arg3[%c0, %c0_0, %c0_1] : memref<1x2x128xf32, #tpu.memory_space<vmem>>, vector<1x2x128xf32>
    %1 = vector.shape_cast %0 : vector<1x2x128xf32> to vector<2x128xf32>
    %c0_2 = arith.constant 0 : index
    %c0_3 = arith.constant 0 : index
    %2 = vector.load %arg4[%c0_2, %c0_3] : memref<2x128xf32, #tpu.memory_space<vmem>>, vector<2x128xf32>
    %3 = arith.addf %1, %2 : vector<2x128xf32>
    %c0_4 = arith.constant 0 : index
    %4 = memref.load %arg2[%c0_4] : memref<1xi32, #tpu.memory_space<smem>>
    %c2_i32 = arith.constant 2 : i32
    %5 = arith.muli %arg1, %c2_i32 : i32
    %c2_i32_5 = arith.constant 2 : i32
    %6 = arith.muli %arg0, %c2_i32_5 : i32
    %7 = arith.addi %5, %6 : i32
    %8 = tpu.iota {dimensions = array<i32: 0>} : vector<2x128xi32>
    %9 = tpu.iota {dimensions = array<i32: 1>} : vector<2x128xi32>
    %10 = vector.broadcast %7 : i32 to vector<2x128xi32>
    %11 = arith.addi %10, %8 : vector<2x128xi32>
    %c128_i32 = arith.constant 128 : i32
    %12 = vector.broadcast %c128_i32 : i32 to vector<2x128xi32>
    %13 = arith.muli %11, %12 : vector<2x128xi32>
    %14 = arith.addi %13, %9 : vector<2x128xi32>
    %c-1640531535_i32 = arith.constant -1640531535 : i32
    %15 = arith.muli %4, %c-1640531535_i32 : i32
    %16 = vector.broadcast %15 : i32 to vector<2x128xi32>
    %17 = arith.xori %14, %16 : vector<2x128xi32>
    %c16_i32 = arith.constant 16 : i32
    %18 = vector.broadcast %c16_i32 : i32 to vector<2x128xi32>
    %19 = arith.shrui %17, %18 : vector<2x128xi32>
    %20 = arith.xori %17, %19 : vector<2x128xi32>
    %c2146121005_i32 = arith.constant 2146121005 : i32
    %21 = vector.broadcast %c2146121005_i32 : i32 to vector<2x128xi32>
    %22 = arith.muli %20, %21 : vector<2x128xi32>
    %c15_i32 = arith.constant 15 : i32
    %23 = vector.broadcast %c15_i32 : i32 to vector<2x128xi32>
    %24 = arith.shrui %22, %23 : vector<2x128xi32>
    %25 = arith.xori %22, %24 : vector<2x128xi32>
    %c-2073254261_i32 = arith.constant -2073254261 : i32
    %26 = vector.broadcast %c-2073254261_i32 : i32 to vector<2x128xi32>
    %27 = arith.muli %25, %26 : vector<2x128xi32>
    %c16_i32_6 = arith.constant 16 : i32
    %28 = vector.broadcast %c16_i32_6 : i32 to vector<2x128xi32>
    %29 = arith.shrui %27, %28 : vector<2x128xi32>
    %30 = arith.xori %27, %29 : vector<2x128xi32>
    %c1_i32 = arith.constant 1 : i32
    %31 = vector.broadcast %c1_i32 : i32 to vector<2x128xi32>
    %32 = arith.shrui %30, %31 : vector<2x128xi32>
    %c214748365_i32 = arith.constant 214748365 : i32
    %33 = vector.broadcast %c214748365_i32 : i32 to vector<2x128xi32>
    %34 = arith.cmpi sge, %32, %33 : vector<2x128xi32>
    %cst = arith.constant 1.11111116 : f32
    %35 = vector.broadcast %cst : f32 to vector<2x128xf32>
    %36 = arith.mulf %3, %35 : vector<2x128xf32>
    %cst_7 = arith.constant 0.000000e+00 : f32
    %37 = vector.broadcast %cst_7 : f32 to vector<2x128xf32>
    %38 = arith.select %34, %36, %37 : vector<2x128xi1>, vector<2x128xf32>
    %c0_8 = arith.constant 0 : index
    %c0_9 = arith.constant 0 : index
    %c0_10 = arith.constant 0 : index
    %39 = vector.load %arg5[%c0_8, %c0_9, %c0_10] : memref<1x2x128xf32, #tpu.memory_space<vmem>>, vector<1x2x128xf32>
    %40 = vector.shape_cast %39 : vector<1x2x128xf32> to vector<2x128xf32>
    %41 = vector.shape_cast %38 : vector<2x128xf32> to vector<1x2x128xf32>
    tpu.vector_store %arg5[%c0_8, %c0_9, %c0_10], %41 {strides = array<i32>} : memref<1x2x128xf32, #tpu.memory_space<vmem>>, vector<1x2x128xf32>,
    return
  }
  func.func @transform_0(%arg0: i32, %arg1: i32, %arg2: memref<1xi32, #tpu.memory_space<smem>>) -> (i32, i32, i32) {
    %c0_i32 = arith.constant 0 : i32
    %c0_i32_0 = arith.constant 0 : i32
    return %arg1, %arg0, %c0_i32 : i32, i32, i32
  }
  func.func @transform_1(%arg0: i32, %arg1: i32, %arg2: memref<1xi32, #tpu.memory_space<smem>>) -> (i32, i32) {
    %c0_i32 = arith.constant 0 : i32
    %c0_i32_0 = arith.constant 0 : i32
    return %arg0, %c0_i32 : i32, i32
  }
  func.func @transform_2(%arg0: i32, %arg1: i32, %arg2: memref<1xi32, #tpu.memory_space<smem>>) -> (i32, i32, i32) {
    %c0_i32 = arith.constant 0 : i32
    %c0_i32_0 = arith.constant 0 : i32
    return %arg1, %arg0, %c0_i32 : i32, i32, i32
  }
}

</mosaic_0001>

<llo_original>
// kernel: tpu_custom_call.1
$region0: #{tpu_custom_call.1}
  #allocation0 [shape = 'u32[]', space=smem, size = 0x4, offset = 0x4, fixed_abs, tag = 'smem constant byte address 0x4 - core index']
  #allocation1 [shape = 'u32[144,128]{1,0:T(1,128)}', space=vmem, size = 0x12000, scoped, tag = 'internal scratch']
  #allocation2 [shape = 's32[1]{0}', space=sflag, size = 0x4, scoped, tag = 'scoped memory for tpu_custom_call.1']
  #allocation3 [shape = 's32[1]{0:T(128)S(6)}', space=smem, size = 0x200, scoped, tag = 'prefetched SMEM operand 0']
  %s0 = inlined_call_operand.<no memory space> [shape: s32[1], index: 0, kind: input, shape index: {}]
  %s1 = inlined_call_operand.hbm [shape: f32[2,2,128], index: 1, kind: input, shape index: {}]
  %s2 = inlined_call_operand.vmem [shape: f32[2,128], index: 2, kind: input, shape index: {}]
  %s3 = inlined_call_operand.hbm [shape: f32[2,2,128], index: 3, kind: output, shape index: {}]
  %s4 = sld [smem:[#allocation0]]
  $region45: #{tpu_custom_call.1} parent=0
    _
  %s6 = ssub.s32 1, %s4
  %s7 = scalar_select 0, %s6, %s4
  %8 = sst [smem:[#allocation3]] %s0
  $region1: #{tpu_custom_call.1} parent=0
    #allocation4 [shape = 'u8[2048]{0}', space=vmem, size = 0x800, scoped, tag = 'input window, operand 1']
    #allocation5 [shape = 's32[2]{0}', space=sflag, size = 0x8, scoped, tag = 'scoped memory for tpu_custom_call.1']
    #allocation6 [shape = 's32[2]{0}', space=sflag, size = 0x8, scoped, tag = 'scoped memory for tpu_custom_call.1']
    #allocation7 [shape = 'u8[2048]{0}', space=vmem, size = 0x800, scoped, tag = 'output window, operand 0']
    %9 = vsyncpa [#allocation5], 0
    %s10 = scalar_lea.sflag [#allocation5], 1
    %11 = vsyncpa %s10, 0
    %12 = vsyncpa [#allocation6], 0
    %s13 = scalar_lea.sflag [#allocation6], 1
    %14 = vsyncpa %s13, 0
    loop: start=0, step=1, limit=4
    $region2: #{tpu_custom_call.1} parent=1 // loop_pre_header
      _
    $region3: #{tpu_custom_call.1} parent=1 // loop_header
      %s16 = sphi 0, %s20
      %p17 = scmp.ge.s32.totalorder %s16, 4
      %s23 = sphi 0, %s35
      %s24 = sphi 0, %s31
      %s25 = sphi 0, %s23
      %s26 = sphi 0, %s24
      %s27 = sphi 0, %s25
      %s28 = sphi 0, %s26
      %s40 = sphi 0, %s42
      %s43 = sphi 0, %s40
      %s44 = sphi 0, %s43
      %s60 = sphi 0, %s44
      %s66 = sphi 0, %s68
      %s69 = sphi 0, %s66
      %s70 = sphi 0, %s69
      %s86 = sphi 0, %s70
      %s94 = sphi 0, %s96
      %s97 = sphi 0, %s94
      %s98 = sphi 0, %s97
      %s114 = sphi 0, %s98
    $region4: #{tpu_custom_call.1} parent=1 // loop_header_branch
      %19 = sbr.rel (%p17) target = $region8
    $region5: #{tpu_custom_call.1} parent=1 // loop_body
      %s21 = ssub.s32 %s16, 1
      %s22 = ssub.s32 %s16, 2
      %s29 = sadd.s32 1, %s24
      %p30 = scmp.ge.s32.totalorder %s29, 2
      %s31 = scalar_select %p30, 0, %s29
      %s32 = sadd.s32 1, %s23
      %s33 = scalar_select %p30, %s32, %s23
      %p34 = scmp.ge.s32.totalorder %s33, 1
      %s35 = scalar_select %p34, 0, %s33
      %s36 = ssub.s32 %s24, %s31
      %s37 = ssub.s32 %s23, %s35
      %s38 = sor.u32 %s36, %s37
      %p39 = scmp.eq.s32.totalorder %s38, 0
      %s41 = sadd.s32 %s40, 1
      %s42 = scalar_select %p39, %s40, %s41
      %p45 = pneg %p39
      %p46 = scmp.eq.s32.totalorder %s16, 1
      %p47 = por %p45, %p46
      %p48 = scmp.ne.s32.totalorder %s40, %s43
      %p49 = scmp.eq.s32.totalorder %s16, 0
      %p50 = por %p48, %p49
      %p51 = scmp.ne.s32.totalorder %s40, %s43
      %p52 = scmp.eq.s32.totalorder %s21, 1
      %p53 = por %p51, %p52
      %p54 = scmp.ne.s32.totalorder %s43, %s44
      %p55 = scmp.eq.s32.totalorder %s21, 0
      %p56 = por %p54, %p55
      %p57 = scmp.ne.s32.totalorder %s43, %s44
      %p58 = scmp.eq.s32.totalorder %s22, 1
      %p59 = por %p57, %p58
      %p61 = scmp.ne.s32.totalorder %s44, %s60
      %p62 = scmp.eq.s32.totalorder %s22, 0
      %p63 = por %p61, %p62
      %s64 = ssub.s32 %s23, %s35
      %p65 = scmp.eq.s32.totalorder %s64, 0
      %s67 = sadd.s32 %s66, 1
      %s68 = scalar_select %p65, %s66, %s67
      %p71 = pneg %p65
      %p72 = scmp.eq.s32.totalorder %s16, 1
      %p73 = por %p71, %p72
      %p74 = scmp.ne.s32.totalorder %s66, %s69
      %p75 = scmp.eq.s32.totalorder %s16, 0
      %p76 = por %p74, %p75
      %p77 = scmp.ne.s32.totalorder %s66, %s69
      %p78 = scmp.eq.s32.totalorder %s21, 1
      %p79 = por %p77, %p78
      %p80 = scmp.ne.s32.totalorder %s69, %s70
      %p81 = scmp.eq.s32.totalorder %s21, 0
      %p82 = por %p80, %p81
      %p83 = scmp.ne.s32.totalorder %s69, %s70
      %p84 = scmp.eq.s32.totalorder %s22, 1
      %p85 = por %p83, %p84
      %p87 = scmp.ne.s32.totalorder %s70, %s86
      %p88 = scmp.eq.s32.totalorder %s22, 0
      %p89 = por %p87, %p88
      %s90 = ssub.s32 %s24, %s31
      %s91 = ssub.s32 %s23, %s35
      %s92 = sor.u32 %s90, %s91
      %p93 = scmp.eq.s32.totalorder %s92, 0
      %s95 = sadd.s32 %s94, 1
      %s96 = scalar_select %p93, %s94, %s95
      %p99 = pneg %p93
      %p100 = scmp.eq.s32.totalorder %s16, 1
      %p101 = por %p99, %p100
      %p102 = scmp.ne.s32.totalorder %s94, %s97
      %p103 = scmp.eq.s32.totalorder %s16, 0
      %p104 = por %p102, %p103
      %p105 = scmp.ne.s32.totalorder %s94, %s97
      %p106 = scmp.eq.s32.totalorder %s21, 1
      %p107 = por %p105, %p106
      %p108 = scmp.ne.s32.totalorder %s97, %s98
      %p109 = scmp.eq.s32.totalorder %s21, 0
      %p110 = por %p108, %p109
      %p111 = scmp.ne.s32.totalorder %s97, %s98
      %p112 = scmp.eq.s32.totalorder %s22, 1
      %p113 = por %p111, %p112
      %p115 = scmp.ne.s32.totalorder %s98, %s114
      %p116 = scmp.eq.s32.totalorder %s22, 0
      %p117 = por %p115, %p116
      %p118 = scmp.le.s32.totalorder 1, %s16
      %p119 = scmp.lt.s32.totalorder %s16, 3
      %p120 = pnand %p118, %p119
      %p121 = pneg %p120
      // Predicated region
      $region9: #{tpu_custom_call.1} parent=5 // pred_check
        _
      $region10: #{tpu_custom_call.1} parent=5 // pred_check_branch
        %123 = sbr.rel (%p120) target = $region12
      $region11: #{tpu_custom_call.1} parent=5 // pred_region
        %s124 = ssub.s32 %s16, 1
        // Predicated region
        $region13: #{tpu_custom_call.1} parent=11 // pred_check
          %p125 = pneg %p82
        $region14: #{tpu_custom_call.1} parent=11 // pred_check_branch
          %127 = sbr.rel (%p125) target = $region16
        $region15: #{tpu_custom_call.1} parent=11 // pred_region
          %p128 = scmp.lt.s32.totalorder %s25, 0
          %s129 = scalar_select %p128, %s25, 0
          %s130 = smul.addr %s129, 2
          %s131 = scalar_lea.vmem %s2, %s130
        $region16: #{tpu_custom_call.1} parent=11 // pred_fallthru
          _
      $region12: #{tpu_custom_call.1} parent=5 // pred_fallthru
        _
      %p132 = scmp.lt.s32.totalorder %s16, 2
      // Predicated region
      $region17: #{tpu_custom_call.1} parent=5 // pred_check
        %p133 = pneg %p132
      $region18: #{tpu_custom_call.1} parent=5 // pred_check_branch
        %135 = sbr.rel (%p133) target = $region20
      $region19: #{tpu_custom_call.1} parent=5 // pred_region
        // Predicated region
        $region21: #{tpu_custom_call.1} parent=19 // pred_check
          %p136 = pneg %p50
        $region22: #{tpu_custom_call.1} parent=19 // pred_check_branch
          %138 = sbr.rel (%p136) target = $region24
        $region23: #{tpu_custom_call.1} parent=19 // pred_region
          %s139 = sand.u32 %s40, 1
          %s140 = scalar_lea.sflag [#allocation5], %s139
          %s141 = sand.u32 %s40, 1
          %s142 = smul.addr %s141, 2
          %s143 = scalar_lea.vmem [#allocation4], %s142
          %s145 = ssub.s32 32, 32
          %146 = vsyncadd %s140, %s145
          %s147 = sadd.s32 %s23, %s24
          %s148 = smul.addr %s147, 32
          %s149 = scalar_lea.hbm %s1, %s148
          %s151 = sshll.u32 %s143, 4
          %s152 = int_to_ptr.vmem [resolvable:$true] %s151
          %154 = dma.hbm_to_vmem [thread:$0]  %s149, 32, %s152, %s140
        $region24: #{tpu_custom_call.1} parent=19 // pred_fallthru
          _
      $region20: #{tpu_custom_call.1} parent=5 // pred_fallthru
        _
      %p155 = scmp.le.s32.totalorder 1, %s16
      %p156 = scmp.lt.s32.totalorder %s16, 3
      %p157 = pnand %p155, %p156
      %p158 = pneg %p157
      // Predicated region
      $region25: #{tpu_custom_call.1} parent=5 // pred_check
        _
      $region26: #{tpu_custom_call.1} parent=5 // pred_check_branch
        %160 = sbr.rel (%p157) target = $region28
      $region27: #{tpu_custom_call.1} parent=5 // pred_region
        %s161 = ssub.s32 %s16, 1
        %s162 = sand.u32 %s43, 1
        %s163 = scalar_lea.sflag [#allocation5], %s162
        %s164 = sand.u32 %s43, 1
        %s165 = smul.addr %s164, 2
        %s166 = scalar_lea.vmem [#allocation4], %s165
        // Predicated region
        $region29: #{tpu_custom_call.1} parent=27 // pred_check
          %p167 = pneg %p56
        $region30: #{tpu_custom_call.1} parent=27 // pred_check_branch
          %169 = sbr.rel (%p167) target = $region32
        $region31: #{tpu_custom_call.1} parent=27 // pred_region
          %170 = dma.done %s163, 32
        $region32: #{tpu_custom_call.1} parent=27 // pred_fallthru
          _
        %s171 = sand.u32 %s43, 1
        %s172 = scalar_lea.sflag [#allocation5], %s171
        %s173 = sand.u32 %s43, 1
        %s174 = smul.addr %s173, 2
        %s175 = scalar_lea.vmem [#allocation4], %s174
        %p176 = pneg %p56
        %p177 = pneg %p53
        %p178 = scmp.lt.s32.totalorder %s25, 0
        %s179 = scalar_select %p178, %s25, 0
        %s180 = smul.addr %s179, 2
        %s181 = scalar_lea.vmem %s2, %s180
        %p182 = pneg %p82
        %p183 = pneg %p79
        %p184 = pneg %p110
        %p185 = pneg %p107
        %s186 = sand.u32 %s97, 1
        %s187 = scalar_lea.sflag [#allocation6], %s186
        %s188 = sand.u32 %s97, 1
        %s189 = smul.addr %s188, 2
        %s190 = scalar_lea.vmem [#allocation7], %s189
        %p191 = scmp.lt.s32.totalorder %s25, 0
        %s192 = scalar_select %p191, %s25, 0
        %s193 = smul.addr %s192, 2
        %s194 = scalar_lea.vmem %s2, %s193
        %v195 = vld [vmem:[%s166] sm:$0x3]
        %v196 = vld [vmem:[%s194] sm:$0x3]
        %v197 = vadd.f32 %v195, %v196
        %s198 = sld [smem:[#allocation3]]
        %s199 = smul.u32 %s26, 2
        %s200 = smul.u32 %s25, 2
        %s201 = sadd.s32 %s199, %s200
        %v202 = vlaneseq
        %v203 = vshrl.u32 %v202, 7
        %v204 = vlaneseq
        %v205 = vand.u32 %v204, 127
        %v206 = vstv %s201
        %v207 = vadd.s32 %v206, %v203
        %v208 = vmul.u32 %v207, 128
        %v209 = vadd.s32 %v208, %v205
        %s210 = smul.u32 %s198, 2654435761
        %v211 = vstv %s210
        %v212 = vxor.u32 %v209, %v211
        %v213 = vshrl.u32 %v212, 16
        %v214 = vxor.u32 %v212, %v213
        %v215 = vmul.u32 %v214, 2146121005
        %v216 = vshrl.u32 %v215, 15
        %v217 = vxor.u32 %v215, %v216
        %v218 = vmul.u32 %v217, 2221713035
        %v219 = vshrl.u32 %v218, 16
        %v220 = vxor.u32 %v218, %v219
        %v221 = vshrl.u32 %v220, 1
        %vm222 = vcmp.ge.s32.totalorder %v221, 214748365
        %v223 = vmul.f32 %v197, 1.1111112
        %v224 = vsel %vm222, %v223, 0.0
        %225 = vst [vmem:[%s190] sm:$0x3] %v224
        %s226 = sand.u32 %s97, 1
        %s227 = scalar_lea.sflag [#allocation6], %s226
        %s228 = sand.u32 %s97, 1
        %s229 = smul.addr %s228, 2
        %s230 = scalar_lea.vmem [#allocation7], %s229
        // Predicated region
        $region33: #{tpu_custom_call.1} parent=27 // pred_check
          %p231 = pneg %p107
        $region34: #{tpu_custom_call.1} parent=27 // pred_check_branch
          %233 = sbr.rel (%p231) target = $region36
        $region35: #{tpu_custom_call.1} parent=27 // pred_region
          %s235 = ssub.s32 32, 32
          %236 = vsyncadd %s227, %s235
          %s237 = sadd.s32 %s25, %s26
          %s238 = smul.addr %s237, 32
          %s239 = scalar_lea.hbm %s3, %s238
          %s241 = sshll.u32 %s230, 4
          %s242 = int_to_ptr.vmem [resolvable:$true] %s241
          %244 = dma.vmem_to_hbm [thread:$0]  %s242, 32, %s239, %s227
        $region36: #{tpu_custom_call.1} parent=27 // pred_fallthru
          _
      $region28: #{tpu_custom_call.1} parent=5 // pred_fallthru
        _
      %p245 = scmp.le.s32.totalorder 2, %s16
      // Predicated region
      $region37: #{tpu_custom_call.1} parent=5 // pred_check
        %p246 = pneg %p245
      $region38: #{tpu_custom_call.1} parent=5 // pred_check_branch
        %248 = sbr.rel (%p246) target = $region40
      $region39: #{tpu_custom_call.1} parent=5 // pred_region
        %s249 = ssub.s32 %s16, 2
        // Predicated region
        $region41: #{tpu_custom_call.1} parent=39 // pred_check
          %p250 = pneg %p113
        $region42: #{tpu_custom_call.1} parent=39 // pred_check_branch
          %252 = sbr.rel (%p250) target = $region44
        $region43: #{tpu_custom_call.1} parent=39 // pred_region
          %s253 = sand.u32 %s98, 1
          %s254 = scalar_lea.sflag [#allocation6], %s253
          %s255 = sand.u32 %s98, 1
          %s256 = smul.addr %s255, 2
          %s257 = scalar_lea.vmem [#allocation7], %s256
          %258 = dma.done %s254, 32
        $region44: #{tpu_custom_call.1} parent=39 // pred_fallthru
          _
      $region40: #{tpu_custom_call.1} parent=5 // pred_fallthru
        _
    $region6: #{tpu_custom_call.1} parent=1 // loop_footer
      %s20 = sadd.s32 1, %s16
    $region7: #{tpu_custom_call.1} parent=1 // loop_footer_branch
      %15 = sbr.rel target = $region3
    $region8: #{tpu_custom_call.1} parent=1 // loop_exit
      _
    %259 = vsyncpa [#allocation5], 1
    %s260 = scalar_lea.sflag [#allocation5], 1
    %261 = vsyncpa %s260, 1
    %262 = vsyncpa [#allocation6], 1
    %s263 = scalar_lea.sflag [#allocation6], 1
    %264 = vsyncpa %s263, 1

</llo_original>
